<compile_context>
chip_gen: v7x
topology: tpu7x:2x2x1
jax: 0.10.0
libtpu: 0.0.40
codegen_flags: <defaults>
</compile_context>

<pallas_src>
import functools

import jax
import jax.numpy as jnp
from jax.experimental import pallas as pl
from jax.experimental.pallas import tpu as pltpu

_NEG_FILL = -1e30  # padding value: exp(_NEG_FILL - row_max) underflows to 0


def _ce_partial_kernel(score_ref, label_ref, out_ref, *, block_n, n_total):
    # score_ref: (TN, Cp) float, label_ref: (TN, 1) int32, out_ref: (1, 128) f32
    s = score_ref[...].astype(jnp.float32)                            # (TN, Cp)
    lbl = label_ref[...]                                              # (TN, 1)

    # numerically stable log-softmax; reuse `shifted` for the target pick
    row_max = jnp.max(s, axis=-1, keepdims=True)                      # (TN, 1)
    shifted = s - row_max                                             # (TN, Cp)
    lse = jnp.log(jnp.sum(jnp.exp(shifted), axis=-1, keepdims=True))  # (TN, 1)

    col_ids = jax.lax.broadcasted_iota(jnp.int32, shifted.shape, 1)   # (TN, Cp)
    picked = jnp.sum(jnp.where(col_ids == lbl, shifted, 0.0),
                     axis=-1, keepdims=True)                          # (TN, 1)

    row_loss = lse - picked                                           # (TN, 1)

    # mask out rows that are pure padding (only the last tile has any)
    row_ids = (jax.lax.broadcasted_iota(jnp.int32, (block_n, 1), 0)
               + pl.program_id(0) * block_n)
    row_loss = jnp.where(row_ids < n_total, row_loss, 0.0)

    partial = jnp.sum(row_loss)
    out_ref[...] = jnp.full((1, 128), partial, dtype=jnp.float32)


def adversarial_loss(score, label):
    """Equivalent of AdversarialLoss.forward: F.cross_entropy(score, label.long())."""
    # TODO(synk): tiny inputs (< a few hundred KB) are cheaper as a plain XLA
    # fusion; production code should dispatch on size. Kernel path kept here.
    # TODO(synk): out-of-range / ignore_index=-100 labels are not validated
    # (they contribute picked=0), unlike F.cross_entropy which would error.
    n, c = score.shape

    # lane-dense class dim (pad with large negative so exp -> 0)
    c_pad = max(128, pl.cdiv(c, 128) * 128)

    # row-tile size: multiple of 8, <= 1024, score tile <= ~4 MiB for v7x VMEM
    max_rows_by_vmem = max(8, ((4 * 1024 * 1024) // (c_pad * 4)) // 8 * 8)
    block_n = min(1024, max_rows_by_vmem, pl.cdiv(n, 8) * 8)
    num_tiles = pl.cdiv(n, block_n)
    n_pad = num_tiles * block_n

    score_p = jnp.pad(score.astype(jnp.float32),
                      ((0, n_pad - n), (0, c_pad - c)),
                      constant_values=_NEG_FILL)
    label_p = jnp.pad(label.astype(jnp.int32), (0, n_pad - n)).reshape(n_pad, 1)

    kernel = functools.partial(_ce_partial_kernel, block_n=block_n, n_total=n)

    cost = pl.CostEstimate(
        flops=6 * n_pad * c_pad,                    # max/sub/exp-adds/mask/sums
        transcendentals=n_pad * c_pad + n_pad,      # exp per element + log per row
        bytes_accessed=score_p.size * 4 + label_p.size * 4 + num_tiles * 128 * 4,
    )

    partials = pl.pallas_call(
        kernel,
        out_shape=jax.ShapeDtypeStruct((num_tiles, 128), jnp.float32),
        grid=(num_tiles,),
        in_specs=[
            pl.BlockSpec((block_n, c_pad), lambda i: (i, 0)),
            pl.BlockSpec((block_n, 1), lambda i: (i, 0)),
        ],
        out_specs=pl.BlockSpec((1, 128), lambda i: (i, 0)),
        compiler_params=pltpu.CompilerParams(
            dimension_semantics=("parallel",),
            vmem_limit_bytes=32 * 1024 * 1024,
        ),
        cost_estimate=cost,
    )(score_p, label_p)

    # per-tile partial sums -> global mean (divide by the true N)
    return jnp.sum(partials[:, 0]) / jnp.float32(n)


if __name__ == "__main__":
    key = jax.random.PRNGKey(0)
    k_score, k_label = jax.random.split(key)

    N, C = 8, 32  # batch of 8 samples, 32 classes
    score = jax.random.normal(k_score, (N, C), dtype=jnp.float32)
    label = jax.random.randint(k_label, (N,), 0, C, dtype=jnp.int32)

    loss = adversarial_loss(score, label)
    jax.block_until_ready(loss)

    # sanity check against a pure-JAX reference
    ref = jnp.mean(
        jax.nn.logsumexp(score, axis=-1)
        - jnp.take_along_axis(score, label[:, None], axis=-1)[:, 0]
    )
    assert jnp.allclose(loss, ref, atol=1e-5, rtol=1e-5), (loss, ref)

    print("KERNEL_OK")
</pallas_src>

<mosaic_0001>
module attributes {stable_mosaic.version = 11 : i64} {
  func.func @_ce_partial_kernel(%arg0: i32, %arg1: memref<8x128xf32, #tpu.memory_space<vmem>>, %arg2: memref<8x1xi32, #tpu.memory_space<vmem>>, %arg3: memref<1x128xf32, #tpu.memory_space<vmem>>) attributes {dimension_semantics = [#tpu.dimension_semantics<parallel>], iteration_bounds = array<i64: 1>, scalar_prefetch = 0 : i64, scratch_operands = 0 : i64, tpu.core_type = #tpu.core_type<tc>, window_params = [{transform_indices = @transform_0, window_bounds = array<i64: 8, 128>}, {transform_indices = @transform_1, window_bounds = array<i64: 8, 1>}, {transform_indices = @transform_2, window_bounds = array<i64: 1, 128>}]} {
    %c0 = arith.constant 0 : index
    %c0_0 = arith.constant 0 : index
    %0 = vector.load %arg1[%c0, %c0_0] : memref<8x128xf32, #tpu.memory_space<vmem>>, vector<8x128xf32>
    %c0_1 = arith.constant 0 : index
    %c0_2 = arith.constant 0 : index
    %1 = vector.load %arg2[%c0_1, %c0_2] : memref<8x1xi32, #tpu.memory_space<vmem>>, vector<8x1xi32>
    %cst = arith.constant dense<0xFF800000> : vector<8xf32>
    %2 = vector.multi_reduction <maximumf>, %0, %cst [1] : vector<8x128xf32> to vector<8xf32>
    %3 = vector.shape_cast %2 : vector<8xf32> to vector<8x1xf32>
    %4 = vector.broadcast %3 : vector<8x1xf32> to vector<8x128xf32>
    %5 = arith.subf %0, %4 : vector<8x128xf32>
    %6 = math.exp %5 : vector<8x128xf32>
    %cst_3 = arith.constant dense<0.000000e+00> : vector<8xf32>
    %7 = vector.multi_reduction <add>, %6, %cst_3 [1] : vector<8x128xf32> to vector<8xf32>
    %8 = vector.shape_cast %7 : vector<8xf32> to vector<8x1xf32>
    %9 = math.log %8 : vector<8x1xf32>
    %10 = tpu.iota {dimensions = array<i32: 1>} : vector<8x128xi32>
    %11 = vector.broadcast %1 : vector<8x1xi32> to vector<8x128xi32>
    %12 = arith.cmpi eq, %10, %11 : vector<8x128xi32>
    %cst_4 = arith.constant 0.000000e+00 : f32
    %13 = vector.broadcast %cst_4 : f32 to vector<8x128xf32>
    %14 = arith.select %12, %5, %13 : vector<8x128xi1>, vector<8x128xf32>
    %cst_5 = arith.constant dense<0.000000e+00> : vector<8xf32>
    %15 = vector.multi_reduction <add>, %14, %cst_5 [1] : vector<8x128xf32> to vector<8xf32>
    %16 = vector.shape_cast %15 : vector<8xf32> to vector<8x1xf32>
    %17 = arith.subf %9, %16 : vector<8x1xf32>
    %18 = tpu.iota {dimensions = array<i32: 0>} : vector<8x1xi32>
    %c8_i32 = arith.constant 8 : i32
    %19 = arith.muli %arg0, %c8_i32 : i32
    %20 = vector.broadcast %19 : i32 to vector<8x1xi32>
    %21 = arith.addi %18, %20 : vector<8x1xi32>
    %c8_i32_6 = arith.constant 8 : i32
    %22 = vector.broadcast %c8_i32_6 : i32 to vector<8x1xi32>
    %23 = arith.cmpi slt, %21, %22 : vector<8x1xi32>
    %cst_7 = arith.constant 0.000000e+00 : f32
    %24 = vector.broadcast %cst_7 : f32 to vector<8x1xf32>
    %25 = arith.select %23, %17, %24 : vector<8x1xi1>, vector<8x1xf32>
    %26 = vector.shape_cast %25 : vector<8x1xf32> to vector<1x8x1xf32>
    %cst_8 = arith.constant dense<0.000000e+00> : vector<1xf32>
    %27 = vector.multi_reduction <add>, %26, %cst_8 [1, 2] : vector<1x8x1xf32> to vector<1xf32>
    %28 = vector.shape_cast %27 : vector<1xf32> to vector<1x1x1xf32>
    %29 = vector.extract %28[0, 0, 0] : f32 from vector<1x1x1xf32>
    %30 = vector.broadcast %29 : f32 to vector<1x128xf32>
    %c0_9 = arith.constant 0 : index
    %c0_10 = arith.constant 0 : index
    %31 = vector.load %arg3[%c0_9, %c0_10] : memref<1x128xf32, #tpu.memory_space<vmem>>, vector<1x128xf32>
    tpu.vector_store %arg3[%c0_9, %c0_10], %30 {strides = array<i32>} : memref<1x128xf32, #tpu.memory_space<vmem>>, vector<1x128xf32>,
    return
  }
  func.func @transform_0(%arg0: i32) -> (i32, i32) {
    %c0_i32 = arith.constant 0 : i32
    %c0_i32_0 = arith.constant 0 : i32
    return %arg0, %c0_i32 : i32, i32
  }
  func.func @transform_1(%arg0: i32) -> (i32, i32) {
    %c0_i32 = arith.constant 0 : i32
    %c0_i32_0 = arith.constant 0 : i32
    return %arg0, %c0_i32 : i32, i32
  }
  func.func @transform_2(%arg0: i32) -> (i32, i32) {
    %c0_i32 = arith.constant 0 : i32
    %c0_i32_0 = arith.constant 0 : i32
    return %arg0, %c0_i32 : i32, i32
  }
}

</mosaic_0001>

<llo_original>
// kernel: tpu_custom_call.1
$region0: #{tpu_custom_call.1}
  #allocation0 [shape = 'u32[]', space=smem, size = 0x4, offset = 0x4, fixed_abs, tag = 'smem constant byte address 0x4 - core index']
  #allocation1 [shape = 'u32[144,128]{1,0:T(1,128)}', space=vmem, size = 0x12000, scoped, tag = 'internal scratch']
  %s0 = inlined_call_operand.vmem [shape: f32[8,128], index: 0, kind: input, shape index: {}]
  %s1 = inlined_call_operand.vmem [shape: s32[8,1], index: 1, kind: input, shape index: {}]
  %s2 = inlined_call_operand.hbm [shape: f32[1,128], index: 2, kind: output, shape index: {}]
  %s3 = sld [smem:[#allocation0]]
  $region18: #{tpu_custom_call.1} parent=0
    _
  %s5 = ssub.s32 1, %s3
  %s6 = scalar_select 0, %s5, %s3
  $region1: #{tpu_custom_call.1} parent=0
    #allocation2 [shape = 'u8[512]{0}', space=vmem, size = 0x400, scoped, tag = 'output window, operand 0, single buffered']
    #allocation3 [shape = 's32[1]{0}', space=sflag, size = 0x4, scoped, tag = 'scoped memory for tpu_custom_call.1']
    %7 = vsyncpa [#allocation3], 0
    // Predicated region
    $region2: #{tpu_custom_call.1} parent=1 // pred_check
      _
    $region3: #{tpu_custom_call.1} parent=1 // pred_check_branch
      %9 = sbr.rel (0) target = $region5
    $region4: #{tpu_custom_call.1} parent=1 // pred_region
      _
    $region5: #{tpu_custom_call.1} parent=1 // pred_fallthru
      _
    // Predicated region
    $region6: #{tpu_custom_call.1} parent=1 // pred_check
      _
    $region7: #{tpu_custom_call.1} parent=1 // pred_check_branch
      %11 = sbr.rel (0) target = $region9
    $region8: #{tpu_custom_call.1} parent=1 // pred_region
      _
    $region9: #{tpu_custom_call.1} parent=1 // pred_fallthru
      _
    %v12 = vld [vmem:[%s0] sm:$0xff]
    %v13 = vld [vmem:[%s1] sm:$0xff]
    %14 = vmax.xlane.f32.xlu0 %v12
    %v15 = vpop.xlane.xlu0 %14
    %v16 = vsub.f32 %v12, %v15
    %v17 = vmul.f32 %v16, 1.442695
    %v18 = vpow.pop %v17
    %19 = vadd.xlane.f32.xlu0 %v18
    %v20 = vpop.xlane.xlu0 %19
    %v21 = vlog2.pop %v20
    %v22 = vmul.f32 %v21, 0.6931472
    %v23 = vlaneseq
    %v24 = vand.u32 %v23, 127
    %25 = vset.pattern.permute.xlu0 0
    %26 = vperm.xlu0 %25, %v13
    %v27 = vpop.permute.xlu0 %26
    %vm28 = vcmp.eq.s32.totalorder %v24, %v27
    %v29 = vsel %vm28, %v16, 0.0
    %30 = vadd.xlane.f32.xlu0 %v29
    %v31 = vpop.xlane.xlu0 %30
    %v32 = vsub.f32 %v22, %v31
    %v33 = vlaneseq
    %v34 = vshrl.u32 %v33, 7
    %s35 = smul.u32 0, 8
    %v36 = vstv %s35
    %v37 = vadd.s32 %v34, %v36
    %vm38 = vcmp.lt.s32.totalorder %v37, 8
    %v39 = vsel %vm38, %v32, 0.0
    %vm40 = vcmask 7168
    %v41 = vsel %vm40, %v39, 0.0
    %42 = vadd.xlane.f32.xlu0 %v41
    %v43 = vpop.xlane.xlu0 %42
    %v44 = vrot.slane %v43, 4
    %v45 = vadd.f32 %v43, %v44
    %v46 = vrot.slane %v45, 2
    %v47 = vadd.f32 %v45, %v46
    %v48 = vrot.slane %v47, 1
    %v49 = vadd.f32 %v47, %v48
    %s50 = vtos %v49
    %v51 = vstv %s50
    %52 = vst [vmem:[#allocation2] sm:$0x1] %v51
    // Predicated region
    $region10: #{tpu_custom_call.1} parent=1 // pred_check
      _
    $region11: #{tpu_custom_call.1} parent=1 // pred_check_branch
      %54 = sbr.rel (0) target = $region13
    $region12: #{tpu_custom_call.1} parent=1 // pred_region
      %s56 = ssub.s32 16, 16
      %57 = vsyncadd [#allocation3], %s56
      %s59 = sshll.u32 [#allocation2], 4
      %s60 = int_to_ptr.vmem [resolvable:$true] %s59
      %62 = dma.vmem_to_hbm [thread:$0]  %s60, 16, %s2, [#allocation3]
    $region13: #{tpu_custom_call.1} parent=1 // pred_fallthru
      _
    // Predicated region
    $region14: #{tpu_custom_call.1} parent=1 // pred_check
      _
    $region15: #{tpu_custom_call.1} parent=1 // pred_check_branch
      %64 = sbr.rel (0) target = $region17
    $region16: #{tpu_custom_call.1} parent=1 // pred_region
      %65 = dma.done [#allocation3], 16
    $region17: #{tpu_custom_call.1} parent=1 // pred_fallthru
      _
    %66 = vsyncpa [#allocation3], 1

</llo_original>
